<compile_context>
chip_gen: v5e
topology: v5e:2x2
jax: 0.10.0
libtpu: 0.0.40
codegen_flags: <defaults>
</compile_context>

<pallas_src>
import functools

import jax
import jax.numpy as jnp
from jax.experimental import pallas as pl
from jax.experimental.pallas import tpu as pltpu


def _ff_kernel(x_ref, g_ref, b_ref, w0_ref, b0_ref, w1_ref, b1_ref, o_ref,
               *, res_factor, eps):
    """One grid step == one tile of TM rows. Fused LN + FC0 + SiLU + FC1 + residual."""
    x = x_ref[...].astype(jnp.float32)                        # (TM, D)

    # --- LayerNorm over the feature (lane) dim ---
    mean = jnp.mean(x, axis=-1, keepdims=True)
    xc = x - mean
    var = jnp.mean(xc * xc, axis=-1, keepdims=True)
    y = xc * jax.lax.rsqrt(var + eps) * g_ref[...] + b_ref[...]

    # --- FC0 (D -> 4D) + SiLU, MXU with f32 accumulation ---
    h = jnp.dot(y, w0_ref[...], preferred_element_type=jnp.float32) + b0_ref[...]
    h = h * jax.nn.sigmoid(h)                                 # SiLU / Swish

    # --- FC1 (4D -> D) ---
    z = jnp.dot(h, w1_ref[...], preferred_element_type=jnp.float32) + b1_ref[...]

    # TODO(synk): dropout0/dropout1 omitted (module default dropout=0.0 / eval mode).
    o_ref[...] = (x + res_factor * z).astype(o_ref.dtype)


def _round_up(n, m):
    return ((n + m - 1) // m) * m


def _run_ff(x2d, gamma, beta, w0_t, b0, w1_t, b1, res_factor, eps, tm):
    N, D = x2d.shape
    H = w0_t.shape[1]                                         # 4 * D
    kernel = functools.partial(_ff_kernel, res_factor=res_factor, eps=eps)
    return pl.pallas_call(
        kernel,
        out_shape=jax.ShapeDtypeStruct((N, D), x2d.dtype),
        grid_spec=pltpu.PrefetchScalarGridSpec(
            num_scalar_prefetch=0,
            grid=(N // tm,),
            in_specs=[
                pl.BlockSpec((tm, D), lambda i: (i, 0)),      # x rows (streamed)
                pl.BlockSpec((1, D), lambda i: (0, 0)),       # LN gamma  (resident)
                pl.BlockSpec((1, D), lambda i: (0, 0)),       # LN beta   (resident)
                pl.BlockSpec((D, H), lambda i: (0, 0)),       # W0^T      (resident)
                pl.BlockSpec((1, H), lambda i: (0, 0)),       # b0        (resident)
                pl.BlockSpec((H, D), lambda i: (0, 0)),       # W1^T      (resident)
                pl.BlockSpec((1, D), lambda i: (0, 0)),       # b1        (resident)
            ],
            out_specs=pl.BlockSpec((tm, D), lambda i: (i, 0)),
        ),
        compiler_params=pltpu.CompilerParams(
            dimension_semantics=("parallel",)),               # row tiles independent
    )(x2d, gamma, beta, w0_t, b0, w1_t, b1)


@functools.partial(jax.jit, static_argnames=("res_factor",))
def ff_forward(x, params, res_factor=0.5):
    """Mirrors FFModule.forward for any leading shape, feature dim last."""
    orig_shape = x.shape
    D = orig_shape[-1]
    x2 = x.reshape(-1, D).astype(jnp.float32)
    N = x2.shape[0]

    # Row tile: big enough to amortize per-grid-step overhead, sublane-aligned.
    tm = 256 if N >= 256 else _round_up(N, 8)
    n_pad = _round_up(N, tm)
    if n_pad != N:
        x2 = jnp.pad(x2, ((0, n_pad - N), (0, 0)))

    out = _run_ff(x2,
                  params["ln_gamma"], params["ln_beta"],
                  params["w0_t"], params["b0"],
                  params["w1_t"], params["b1"],
                  res_factor, 1e-5, tm)
    return out[:N].reshape(orig_shape)


def init_ff_params(key, idim):
    """PyTorch defaults: LayerNorm gamma=1/beta=0; Linear U(-1/sqrt(fan_in), 1/sqrt(fan_in))."""
    hdim = 4 * idim
    k0w, k0b, k1w, k1b = jax.random.split(key, 4)
    s0 = 1.0 / (idim ** 0.5)
    s1 = 1.0 / (hdim ** 0.5)
    w0 = jax.random.uniform(k0w, (hdim, idim), jnp.float32, -s0, s0)   # torch layout (out, in)
    b0 = jax.random.uniform(k0b, (hdim,), jnp.float32, -s0, s0)
    w1 = jax.random.uniform(k1w, (idim, hdim), jnp.float32, -s1, s1)
    b1 = jax.random.uniform(k1b, (idim,), jnp.float32, -s1, s1)
    return {
        "ln_gamma": jnp.ones((1, idim), jnp.float32),
        "ln_beta": jnp.zeros((1, idim), jnp.float32),
        "w0_t": w0.T,                      # (D, 4D)
        "b0": b0.reshape(1, hdim),         # (1, 4D)
        "w1_t": w1.T,                      # (4D, D)
        "b1": b1.reshape(1, idim),         # (1, D)
    }


def ff_reference(x, params, res_factor=0.5, eps=1e-5):
    """Pure-JAX reference of FFModule.forward (dropout=0)."""
    mean = jnp.mean(x, axis=-1, keepdims=True)
    var = jnp.mean((x - mean) ** 2, axis=-1, keepdims=True)
    y = (x - mean) / jnp.sqrt(var + eps) * params["ln_gamma"][0] + params["ln_beta"][0]
    h = y @ params["w0_t"] + params["b0"][0]
    h = h * jax.nn.sigmoid(h)
    z = h @ params["w1_t"] + params["b1"][0]
    return x + res_factor * z


if __name__ == "__main__":
    B, T, IDIM = 2, 8, 32
    RES_FACTOR = 0.5

    key = jax.random.PRNGKey(0)
    kx, kp = jax.random.split(key)
    x = jax.random.normal(kx, (B, T, IDIM), jnp.float32)
    params = init_ff_params(kp, IDIM)

    out = ff_forward(x, params, res_factor=RES_FACTOR)
    jax.block_until_ready(out)

    assert out.shape == (B, T, IDIM)
    ref = ff_reference(x, params, res_factor=RES_FACTOR)
    assert jnp.allclose(out, ref, rtol=1e-4, atol=1e-4), \
        f"max abs err {float(jnp.max(jnp.abs(out - ref)))}"
    print("KERNEL_OK")
</pallas_src>

<mosaic_0001>
module attributes {stable_mosaic.version = 11 : i64} {
  func.func @_ff_kernel(%arg0: i32, %arg1: memref<16x32xf32, #tpu.memory_space<vmem>>, %arg2: memref<1x32xf32, #tpu.memory_space<vmem>>, %arg3: memref<1x32xf32, #tpu.memory_space<vmem>>, %arg4: memref<32x128xf32, #tpu.memory_space<vmem>>, %arg5: memref<1x128xf32, #tpu.memory_space<vmem>>, %arg6: memref<128x32xf32, #tpu.memory_space<vmem>>, %arg7: memref<1x32xf32, #tpu.memory_space<vmem>>, %arg8: memref<16x32xf32, #tpu.memory_space<vmem>>) attributes {dimension_semantics = [#tpu.dimension_semantics<parallel>], iteration_bounds = array<i64: 1>, scalar_prefetch = 0 : i64, scratch_operands = 0 : i64, tpu.core_type = #tpu.core_type<tc>, window_params = [{transform_indices = @transform_0, window_bounds = array<i64: 16, 32>}, {pipeline_mode = #tpu.pipeline_mode<synchronous>, transform_indices = @transform_1, window_bounds = array<i64: 1, 32>}, {pipeline_mode = #tpu.pipeline_mode<synchronous>, transform_indices = @transform_2, window_bounds = array<i64: 1, 32>}, {pipeline_mode = #tpu.pipeline_mode<synchronous>, transform_indices = @transform_3, window_bounds = array<i64: 32, 128>}, {pipeline_mode = #tpu.pipeline_mode<synchronous>, transform_indices = @transform_4, window_bounds = array<i64: 1, 128>}, {pipeline_mode = #tpu.pipeline_mode<synchronous>, transform_indices = @transform_5, window_bounds = array<i64: 128, 32>}, {pipeline_mode = #tpu.pipeline_mode<synchronous>, transform_indices = @transform_6, window_bounds = array<i64: 1, 32>}, {transform_indices = @transform_7, window_bounds = array<i64: 16, 32>}]} {
    %c0 = arith.constant 0 : index
    %c0_0 = arith.constant 0 : index
    %0 = vector.load %arg1[%c0, %c0_0] : memref<16x32xf32, #tpu.memory_space<vmem>>, vector<16x32xf32>
    %cst = arith.constant dense<0.000000e+00> : vector<16xf32>
    %1 = vector.multi_reduction <add>, %0, %cst [1] : vector<16x32xf32> to vector<16xf32>
    %2 = vector.shape_cast %1 : vector<16xf32> to vector<16x1xf32>
    %cst_1 = arith.constant 3.200000e+01 : f32
    %3 = vector.broadcast %cst_1 : f32 to vector<16x1xf32>
    %4 = arith.divf %2, %3 : vector<16x1xf32>
    %5 = vector.broadcast %4 : vector<16x1xf32> to vector<16x32xf32>
    %6 = arith.subf %0, %5 : vector<16x32xf32>
    %7 = arith.mulf %6, %6 : vector<16x32xf32>
    %cst_2 = arith.constant dense<0.000000e+00> : vector<16xf32>
    %8 = vector.multi_reduction <add>, %7, %cst_2 [1] : vector<16x32xf32> to vector<16xf32>
    %9 = vector.shape_cast %8 : vector<16xf32> to vector<16x1xf32>
    %cst_3 = arith.constant 3.200000e+01 : f32
    %10 = vector.broadcast %cst_3 : f32 to vector<16x1xf32>
    %11 = arith.divf %9, %10 : vector<16x1xf32>
    %cst_4 = arith.constant 9.99999974E-6 : f32
    %12 = vector.broadcast %cst_4 : f32 to vector<16x1xf32>
    %13 = arith.addf %11, %12 : vector<16x1xf32>
    %14 = math.rsqrt %13 : vector<16x1xf32>
    %15 = vector.broadcast %14 : vector<16x1xf32> to vector<16x32xf32>
    %16 = arith.mulf %6, %15 : vector<16x32xf32>
    %c0_5 = arith.constant 0 : index
    %c0_6 = arith.constant 0 : index
    %17 = vector.load %arg2[%c0_5, %c0_6] : memref<1x32xf32, #tpu.memory_space<vmem>>, vector<1x32xf32>
    %18 = vector.broadcast %17 : vector<1x32xf32> to vector<16x32xf32>
    %19 = arith.mulf %16, %18 : vector<16x32xf32>
    %c0_7 = arith.constant 0 : index
    %c0_8 = arith.constant 0 : index
    %20 = vector.load %arg3[%c0_7, %c0_8] : memref<1x32xf32, #tpu.memory_space<vmem>>, vector<1x32xf32>
    %21 = vector.broadcast %20 : vector<1x32xf32> to vector<16x32xf32>
    %22 = arith.addf %19, %21 : vector<16x32xf32>
    %c0_9 = arith.constant 0 : index
    %c0_10 = arith.constant 0 : index
    %23 = vector.load %arg4[%c0_9, %c0_10] : memref<32x128xf32, #tpu.memory_space<vmem>>, vector<32x128xf32>
    %cst_11 = arith.constant dense<0.000000e+00> : vector<16x128xf32>
    %24 = tpu.matmul %22, %23, %cst_11 {dimension_numbers = #tpu.dot_dimension_numbers<[1], [0], [0], [1], [0, 0, 1, 1], [], []>} : vector<16x32xf32>, vector<32x128xf32>, vector<16x128xf32> -> vector<16x128xf32>
    %c0_12 = arith.constant 0 : index
    %c0_13 = arith.constant 0 : index
    %25 = vector.load %arg5[%c0_12, %c0_13] : memref<1x128xf32, #tpu.memory_space<vmem>>, vector<1x128xf32>
    %26 = vector.broadcast %25 : vector<1x128xf32> to vector<16x128xf32>
    %27 = arith.addf %24, %26 : vector<16x128xf32>
    %28 = arith.negf %27 : vector<16x128xf32>
    %29 = math.exp %28 : vector<16x128xf32>
    %cst_14 = arith.constant 1.000000e+00 : f32
    %30 = vector.broadcast %cst_14 : f32 to vector<16x128xf32>
    %31 = arith.addf %30, %29 : vector<16x128xf32>
    %32 = arith.divf %30, %31 : vector<16x128xf32>
    %33 = arith.mulf %27, %32 : vector<16x128xf32>
    %c0_15 = arith.constant 0 : index
    %c0_16 = arith.constant 0 : index
    %34 = vector.load %arg6[%c0_15, %c0_16] : memref<128x32xf32, #tpu.memory_space<vmem>>, vector<128x32xf32>
    %cst_17 = arith.constant dense<0.000000e+00> : vector<16x32xf32>
    %35 = tpu.matmul %33, %34, %cst_17 {dimension_numbers = #tpu.dot_dimension_numbers<[1], [0], [0], [1], [0, 0, 1, 1], [], []>} : vector<16x128xf32>, vector<128x32xf32>, vector<16x32xf32> -> vector<16x32xf32>
    %c0_18 = arith.constant 0 : index
    %c0_19 = arith.constant 0 : index
    %36 = vector.load %arg7[%c0_18, %c0_19] : memref<1x32xf32, #tpu.memory_space<vmem>>, vector<1x32xf32>
    %37 = vector.broadcast %36 : vector<1x32xf32> to vector<16x32xf32>
    %38 = arith.addf %35, %37 : vector<16x32xf32>
    %cst_20 = arith.constant 5.000000e-01 : f32
    %39 = vector.broadcast %cst_20 : f32 to vector<16x32xf32>
    %40 = arith.mulf %39, %38 : vector<16x32xf32>
    %41 = arith.addf %0, %40 : vector<16x32xf32>
    %c0_21 = arith.constant 0 : index
    %c0_22 = arith.constant 0 : index
    %42 = vector.load %arg8[%c0_21, %c0_22] : memref<16x32xf32, #tpu.memory_space<vmem>>, vector<16x32xf32>
    tpu.vector_store %arg8[%c0_21, %c0_22], %41 {strides = array<i32>} : memref<16x32xf32, #tpu.memory_space<vmem>>, vector<16x32xf32>,
    return
  }
  func.func @transform_0(%arg0: i32) -> (i32, i32) {
    %c0_i32 = arith.constant 0 : i32
    %c0_i32_0 = arith.constant 0 : i32
    return %arg0, %c0_i32 : i32, i32
  }
  func.func @transform_1(%arg0: i32) -> (i32, i32) {
    %c0_i32 = arith.constant 0 : i32
    %c0_i32_0 = arith.constant 0 : i32
    %c0_i32_1 = arith.constant 0 : i32
    return %c0_i32, %c0_i32_0 : i32, i32
  }
  func.func @transform_2(%arg0: i32) -> (i32, i32) {
    %c0_i32 = arith.constant 0 : i32
    %c0_i32_0 = arith.constant 0 : i32
    %c0_i32_1 = arith.constant 0 : i32
    return %c0_i32, %c0_i32_0 : i32, i32
  }
  func.func @transform_3(%arg0: i32) -> (i32, i32) {
    %c0_i32 = arith.constant 0 : i32
    %c0_i32_0 = arith.constant 0 : i32
    %c0_i32_1 = arith.constant 0 : i32
    return %c0_i32, %c0_i32_0 : i32, i32
  }
  func.func @transform_4(%arg0: i32) -> (i32, i32) {
    %c0_i32 = arith.constant 0 : i32
    %c0_i32_0 = arith.constant 0 : i32
    %c0_i32_1 = arith.constant 0 : i32
    return %c0_i32, %c0_i32_0 : i32, i32
  }
  func.func @transform_5(%arg0: i32) -> (i32, i32) {
    %c0_i32 = arith.constant 0 : i32
    %c0_i32_0 = arith.constant 0 : i32
    %c0_i32_1 = arith.constant 0 : i32
    return %c0_i32, %c0_i32_0 : i32, i32
  }
  func.func @transform_6(%arg0: i32) -> (i32, i32) {
    %c0_i32 = arith.constant 0 : i32
    %c0_i32_0 = arith.constant 0 : i32
    %c0_i32_1 = arith.constant 0 : i32
    return %c0_i32, %c0_i32_0 : i32, i32
  }
  func.func @transform_7(%arg0: i32) -> (i32, i32) {
    %c0_i32 = arith.constant 0 : i32
    %c0_i32_0 = arith.constant 0 : i32
    return %arg0, %c0_i32 : i32, i32
  }
}

</mosaic_0001>

<llo_original>
// kernel: ff_forward.1
$region0: #{ff_forward.1}
  #allocation0 [shape = 'u32[]', space=smem, size = 0x4, offset = 0x4, fixed_abs, tag = 'smem constant byte address 0x4 - core index']
  #allocation1 [shape = 'u32[72,128]{1,0:T(1,128)}', space=vmem, size = 0x9000, scoped, tag = 'internal scratch']
  %s0 = inlined_call_operand.vmem [shape: f32[16,32], index: 0, kind: input, shape index: {}]
  %s1 = inlined_call_operand.vmem [shape: f32[1,32], index: 1, kind: input, shape index: {}]
  %s2 = inlined_call_operand.vmem [shape: f32[1,32], index: 2, kind: input, shape index: {}]
  %s3 = inlined_call_operand.vmem [shape: f32[32,128], index: 3, kind: input, shape index: {}]
  %s4 = inlined_call_operand.vmem [shape: f32[1,128], index: 4, kind: input, shape index: {}]
  %s5 = inlined_call_operand.vmem [shape: f32[128,32], index: 5, kind: input, shape index: {}]
  %s6 = inlined_call_operand.vmem [shape: f32[1,32], index: 6, kind: input, shape index: {}]
  %s7 = inlined_call_operand.hbm [shape: f32[16,32], index: 7, kind: output, shape index: {}]
  %s8 = sld [smem:[#allocation0]]
  $region38: #{ff_forward.1} parent=0
    _
  %s10 = ssub.s32 1, %s8
  %s11 = scalar_select 0, %s10, %s8
  $region1: #{ff_forward.1} parent=0
    #allocation2 [shape = 'u8[8192]{0}', space=vmem, size = 0x2000, scoped, tag = 'output window, operand 0, single buffered']
    #allocation3 [shape = 's32[1]{0}', space=sflag, size = 0x4, scoped, tag = 'scoped memory for ff_forward.1']
    %12 = vsyncpa [#allocation3], 0
    // Predicated region
    $region2: #{ff_forward.1} parent=1 // pred_check
      _
    $region3: #{ff_forward.1} parent=1 // pred_check_branch
      %14 = sbr.rel (0) target = $region5
    $region4: #{ff_forward.1} parent=1 // pred_region
      _
    $region5: #{ff_forward.1} parent=1 // pred_fallthru
      _
    // Predicated region
    $region6: #{ff_forward.1} parent=1 // pred_check
      _
    $region7: #{ff_forward.1} parent=1 // pred_check_branch
      %16 = sbr.rel (0) target = $region9
    $region8: #{ff_forward.1} parent=1 // pred_region
      _
    $region9: #{ff_forward.1} parent=1 // pred_fallthru
      _
    // Predicated region
    $region10: #{ff_forward.1} parent=1 // pred_check
      _
    $region11: #{ff_forward.1} parent=1 // pred_check_branch
      %18 = sbr.rel (0) target = $region13
    $region12: #{ff_forward.1} parent=1 // pred_region
      _
    $region13: #{ff_forward.1} parent=1 // pred_fallthru
      _
    // Predicated region
    $region14: #{ff_forward.1} parent=1 // pred_check
      _
    $region15: #{ff_forward.1} parent=1 // pred_check_branch
      %20 = sbr.rel (0) target = $region17
    $region16: #{ff_forward.1} parent=1 // pred_region
      _
    $region17: #{ff_forward.1} parent=1 // pred_fallthru
      _
    // Predicated region
    $region18: #{ff_forward.1} parent=1 // pred_check
      _
    $region19: #{ff_forward.1} parent=1 // pred_check_branch
      %22 = sbr.rel (0) target = $region21
    $region20: #{ff_forward.1} parent=1 // pred_region
      _
    $region21: #{ff_forward.1} parent=1 // pred_fallthru
      _
    // Predicated region
    $region22: #{ff_forward.1} parent=1 // pred_check
      _
    $region23: #{ff_forward.1} parent=1 // pred_check_branch
      %24 = sbr.rel (0) target = $region25
    $region24: #{ff_forward.1} parent=1 // pred_region
      _
    $region25: #{ff_forward.1} parent=1 // pred_fallthru
      _
    // Predicated region
    $region26: #{ff_forward.1} parent=1 // pred_check
      _
    $region27: #{ff_forward.1} parent=1 // pred_check_branch
      %26 = sbr.rel (0) target = $region29
    $region28: #{ff_forward.1} parent=1 // pred_region
      _
    $region29: #{ff_forward.1} parent=1 // pred_fallthru
      _
    %v27 = vld [vmem:[%s0] sm:$0xff]
    %v28 = vld [vmem:[%s0 + $0x8] sm:$0xff]
    %vm29 = vcmask 261120
    %v30 = vsel %vm29, %v27, 0.0
    %31 = vadd.xlane.f32.xlu0 %v30
    %v32 = vpop.xlane.xlu0 %31
    %v33 = vsel %vm29, %v28, 0.0
    %34 = vadd.xlane.f32.xlu0 %v33
    %v35 = vpop.xlane.xlu0 %34
    %v36 = vrcp.pop 32.0
    %v37 = vmul.f32 32.0, %v36
    %v38 = vsub.f32 1.0, %v37
    %v39 = vmul.f32 %v36, %v38
    %v40 = vadd.f32 %v36, %v39
    %vm41 = vweird.f32 %v36
    %v42 = vsel %vm41, %v36, %v40
    %v43 = vmul.f32 %v32, %v42
    %v44 = vmul.f32 %v35, %v42
    %v45 = vsub.f32 %v27, %v43
    %v46 = vsub.f32 %v28, %v44
    %v47 = vmul.f32 %v45, %v45
    %v48 = vmul.f32 %v46, %v46
    %v49 = vsel %vm29, %v47, 0.0
    %50 = vadd.xlane.f32.xlu0 %v49
    %v51 = vpop.xlane.xlu0 %50
    %v52 = vsel %vm29, %v48, 0.0
    %53 = vadd.xlane.f32.xlu0 %v52
    %v54 = vpop.xlane.xlu0 %53
    %v55 = vmul.f32 %v51, %v42
    %v56 = vmul.f32 %v54, %v42
    %v57 = vadd.f32 %v55, 1e-05
    %v58 = vadd.f32 %v56, 1e-05
    %v59 = vrsqrt.pop %v57
    %v60 = vmul.f32 %v59, %v57
    %v61 = vmul.f32 %v60, %v59
    %v62 = vmul.f32 0.5, %v61
    %v63 = vsub.f32 1.5, %v62
    %v64 = vmul.f32 %v59, %v63
    %vm65 = vweird.f32 %v57
    %vm66 = vweird.f32 %v59
    %vm67 = vmor %vm65, %vm66
    %v68 = vsel %vm67, %v59, %v64
    %v69 = vrsqrt.pop %v58
    %v70 = vmul.f32 %v69, %v58
    %v71 = vmul.f32 %v70, %v69
    %v72 = vmul.f32 0.5, %v71
    %v73 = vsub.f32 1.5, %v72
    %v74 = vmul.f32 %v69, %v73
    %vm75 = vweird.f32 %v58
    %vm76 = vweird.f32 %v69
    %vm77 = vmor %vm75, %vm76
    %v78 = vsel %vm77, %v69, %v74
    %v79 = vmul.f32 %v45, %v68
    %v80 = vmul.f32 %v46, %v78
    %v81 = vld [vmem:[%s1] sm:$0x1]
    %v83 = vperm.slane %v81, 0
    %v85 = vmul.f32 %v79, %v83
    %v86 = vmul.f32 %v80, %v83
    %v87 = vld [vmem:[%s2] sm:$0x1]
    %v89 = vperm.slane %v87, 0
    %v91 = vadd.f32 %v85, %v89
    %v92 = vadd.f32 %v86, %v89
    %v93 = vld [vmem:[%s3] sm:$0xff]
    %v94 = vld [vmem:[%s3 + $0x8] sm:$0xff]
    %v95 = vld [vmem:[%s3 + $0x10] sm:$0xff]
    %v96 = vld [vmem:[%s3 + $0x18] sm:$0xff]
    %v97 = vld [vmem:[%s4] sm:$0x1]
    %v99 = vperm.slane %v97, 0
    %v102 = vsel %vm29, %v91, 0
    %v105 = vsel %vm29, %v92, 0
    %107 = vmatpush.msra.mxu0 0.0
    %108 = vmatpush.msra.mxu0 0.0
    %109 = vmatpush.msra.mxu0 0.0
    %110 = vmatpush.msra.mxu0 0.0
    %111 = vmatpush.msra.mxu0 0.0
    %112 = vmatpush.msra.mxu0 0.0
    %113 = vmatpush.msra.mxu0 0.0
    %114 = vmatpush.msra.mxu0 0.0
    %115 = vmatpush.msra.mxu0 0.0
    %116 = vmatpush.msra.mxu0 0.0
    %117 = vmatpush.msra.mxu0 0.0
    %118 = vmatpush.msra.mxu0 0.0
    %119 = vmatpush.msra.mxu0 %v96
    %120 = vmatpush.msra.mxu0 %v95
    %121 = vmatpush.msra.mxu0 %v94
    %122 = vmatpush.msra.mxu0 %v93
    %123 = vmatmul.f32.gmra.mxu0 %v102
    %v124 = vpop.f32.mrf.mxu0
    %v125 = vadd.f32 %v99, %v124
    %126 = vmatmul.f32.gmra.mxu0 %v105
    %v127 = vpop.f32.mrf.mxu0
    %v128 = vadd.f32 %v99, %v127
    %129 = vdwg.mxu0
    %v130 = vxor.u32 %v125, 2147483648
    %v131 = vxor.u32 %v128, 2147483648
    %v132 = vmul.f32 %v130, 1.442695
    %v133 = vpow.pop %v132
    %v134 = vmul.f32 %v131, 1.442695
    %v135 = vpow.pop %v134
    %v136 = vadd.f32 %v133, 1.0
    %v137 = vadd.f32 %v135, 1.0
    %v138 = vrcp.pop %v136
    %v139 = vmul.f32 %v136, %v138
    %v140 = vsub.f32 1.0, %v139
    %v141 = vmul.f32 %v138, %v140
    %v142 = vadd.f32 %v138, %v141
    %vm143 = vweird.f32 %v136
    %vm144 = vweird.f32 %v138
    %vm145 = vmor %vm143, %vm144
    %v146 = vsel %vm145, %v138, %v142
    %v147 = vand.u32 2147483647, %v136
    %vm148 = vcmp.eq.f32.partialorder %v147, 8.507059e+37
    %v149 = vand.u32 %v136, 2147483648
    %v150 = vor.u32 1.1754944e-38, %v149
    %v151 = vsel %vm148, %v150, %v146
    %v152 = vmul.f32 1.0, %v151
    %v153 = vrcp.pop %v137
    %v154 = vmul.f32 %v137, %v153
    %v155 = vsub.f32 1.0, %v154
    %v156 = vmul.f32 %v153, %v155
    %v157 = vadd.f32 %v153, %v156
    %vm158 = vweird.f32 %v137
    %vm159 = vweird.f32 %v153
    %vm160 = vmor %vm158, %vm159
    %v161 = vsel %vm160, %v153, %v157
    %v162 = vand.u32 2147483647, %v137
    %vm163 = vcmp.eq.f32.partialorder %v162, 8.507059e+37
    %v164 = vand.u32 %v137, 2147483648
    %v165 = vor.u32 1.1754944e-38, %v164
    %v166 = vsel %vm163, %v165, %v161
    %v167 = vmul.f32 1.0, %v166
    %v168 = vmul.f32 %v125, %v152
    %v169 = vmul.f32 %v128, %v167
    %v170 = vld [vmem:[%s5] sm:$0xff]
    %v171 = vld [vmem:[%s5 + $0x8] sm:$0xff]
    %v172 = vld [vmem:[%s5 + $0x10] sm:$0xff]
    %v173 = vld [vmem:[%s5 + $0x18] sm:$0xff]
    %v174 = vld [vmem:[%s5 + $0x20] sm:$0xff]
    %v175 = vld [vmem:[%s5 + $0x28] sm:$0xff]
    %v176 = vld [vmem:[%s5 + $0x30] sm:$0xff]
    %v177 = vld [vmem:[%s5 + $0x38] sm:$0xff]
    %v178 = vld [vmem:[%s5 + $0x40] sm:$0xff]
    %v179 = vld [vmem:[%s5 + $0x48] sm:$0xff]
    %v180 = vld [vmem:[%s5 + $0x50] sm:$0xff]
    %v181 = vld [vmem:[%s5 + $0x58] sm:$0xff]
    %v182 = vld [vmem:[%s5 + $0x60] sm:$0xff]
    %v183 = vld [vmem:[%s5 + $0x68] sm:$0xff]
    %v184 = vld [vmem:[%s5 + $0x70] sm:$0xff]
    %v185 = vld [vmem:[%s5 + $0x78] sm:$0xff]
    %v186 = vld [vmem:[%s6] sm:$0x1]
    %v188 = vperm.slane %v186, 0
    %190 = vmatpush.msra.mxu0 %v185
    %191 = vmatpush.msra.mxu0 %v184
    %192 = vmatpush.msra.mxu0 %v183
    %193 = vmatpush.msra.mxu0 %v182
    %194 = vmatpush.msra.mxu0 %v181
    %195 = vmatpush.msra.mxu0 %v180
    %196 = vmatpush.msra.mxu0 %v179
    %197 = vmatpush.msra.mxu0 %v178
    %198 = vmatpush.msra.mxu0 %v177
    %199 = vmatpush.msra.mxu0 %v176
    %200 = vmatpush.msra.mxu0 %v175
    %201 = vmatpush.msra.mxu0 %v174
    %202 = vmatpush.msra.mxu0 %v173
    %203 = vmatpush.msra.mxu0 %v172
    %204 = vmatpush.msra.mxu0 %v171
    %205 = vmatpush.msra.mxu0 %v170
    %206 = vmatmul.f32.gmra.mxu0 %v168
    %v207 = vpop.f32.mrf.mxu0
    %v208 = vadd.f32 %v188, %v207
    %209 = vmatmul.f32.gmra.mxu0 %v169
    %v210 = vpop.f32.mrf.mxu0
    %v211 = vadd.f32 %v188, %v210
    %212 = vdwg.mxu0
    %v213 = vmul.f32 %v208, 0.5
    %v214 = vmul.f32 %v211, 0.5
    %v215 = vadd.f32 %v27, %v213
    %v216 = vadd.f32 %v28, %v214
    %217 = vst.msk [vmem:[#allocation2] sm:$0xff] %vm29, %v215
    %218 = vst.msk [vmem:[#allocation2 + $0x8] sm:$0xff] %vm29, %v216
    // Predicated region
    $region30: #{ff_forward.1} parent=1 // pred_check
      _
    $region31: #{ff_forward.1} parent=1 // pred_check_branch
      %220 = sbr.rel (0) target = $region33
    $region32: #{ff_forward.1} parent=1 // pred_region
      %222 = vsyncadd [#allocation3], 0
      %s223 = sshll.u32 [#allocation2], 4
      %s224 = int_to_ptr.vmem [resolvable:$true] %s223
      %s225 = sshll.u32 %s7, 4
      %s226 = int_to_ptr.hbm [resolvable:$true] %s225
      %231 = dma.vmem_to_hbm [thread:$0]  %s224, 256, %s226, [#allocation3], 128, 128, 8
    $region33: #{ff_forward.1} parent=1 // pred_fallthru
      _
    // Predicated region
    $region34: #{ff_forward.1} parent=1 // pred_check
      _
    $region35: #{ff_forward.1} parent=1 // pred_check_branch
      %233 = sbr.rel (0) target = $region37
    $region36: #{ff_forward.1} parent=1 // pred_region
      %235 = dma.done [#allocation3], 256
    $region37: #{ff_forward.1} parent=1 // pred_fallthru
      _
    %236 = vsyncpa [#allocation3], 1

</llo_original>
